<compile_context>
chip_gen: v6e
topology: v6e:2x2x1
jax: 0.10.0
libtpu: 0.0.40
codegen_flags: <defaults>
</compile_context>

<pallas_src>
import jax
import jax.numpy as jnp
from jax.experimental import pallas as pl
from jax.experimental.pallas import tpu as pltpu

LANE = 128
SUBLANE = 8


def _round_up(n, m):
    return ((n + m - 1) // m) * m


def blob_mlp_kernel(x_ref, w1_ref, b1_ref, w2_ref, b2_ref, w3_ref, b3_ref, o_ref):
    """Fused 3-layer MLP on one (tile_b, .) batch tile.

    Weights are (in_padded, out_padded) f32 with zero padding; padded rows /
    columns are inert so results match the unpadded reference exactly.
    """
    tile_b = x_ref.shape[0]
    x = x_ref[...]                     # (tile_b, in_f) f32
    w1 = w1_ref[...]                   # (in_f, pad_h)

    # ---- Layer 1 (K = in_f, tiny): VPU unroll, bias seeds the accumulator ----
    h1 = jnp.broadcast_to(b1_ref[...], (tile_b, b1_ref.shape[1]))
    for k in range(x_ref.shape[1]):
        h1 = h1 + x[:, k:k + 1] * w1[k:k + 1, :]
    h1 = jnp.maximum(h1, 0.0)          # padded lanes stay exactly 0

    # ---- Layer 2 (K = pad_h): MXU matmul, f32 accumulation ----
    h2 = jnp.dot(h1, w2_ref[...], preferred_element_type=jnp.float32) + b2_ref[...]
    h2 = jnp.maximum(h2, 0.0)

    # ---- Layer 3 (K = pad_h): MXU matmul; store only the real output columns ----
    out = jnp.dot(h2, w3_ref[...], preferred_element_type=jnp.float32) + b3_ref[...]
    o_ref[...] = out[:, :o_ref.shape[1]].astype(o_ref.dtype)


def prepare_params(params):
    """One-time prep: transpose to (in, out), cast to f32, zero-pad to lane-dense
    MXU-friendly layouts.  PyTorch nn.Linear convention in `params`:
    weight (out_features, in_features), bias (out_features,)."""
    w1, b1 = params["w1"], params["b1"]
    w2, b2 = params["w2"], params["b2"]
    w3, b3 = params["w3"], params["b3"]

    in_f = w1.shape[1]
    hidden = w1.shape[0]
    out_f = w3.shape[0]
    pad_h = _round_up(hidden, LANE)
    pad_o = _round_up(out_f, LANE)

    def pad_to(a, rows, cols):
        return jnp.pad(a, ((0, rows - a.shape[0]), (0, cols - a.shape[1])))

    return {
        "w1": pad_to(w1.T.astype(jnp.float32), in_f, pad_h),    # (in_f,  pad_h)
        "b1": pad_to(b1.astype(jnp.float32)[None, :], 1, pad_h),
        "w2": pad_to(w2.T.astype(jnp.float32), pad_h, pad_h),   # (pad_h, pad_h)
        "b2": pad_to(b2.astype(jnp.float32)[None, :], 1, pad_h),
        "w3": pad_to(w3.T.astype(jnp.float32), pad_h, pad_o),   # (pad_h, pad_o)
        "b3": pad_to(b3.astype(jnp.float32)[None, :], 1, pad_o),
        "in_features": in_f,
        "hidden_units": hidden,
        "out_features": out_f,
    }


def blob_model_forward(x, prepped, *, tile_b=2048):
    """Forward pass of BlobModel given prepare_params() output."""
    in_f = prepped["in_features"]
    hidden = prepped["hidden_units"]
    out_f = prepped["out_features"]
    w1_p, b1_p = prepped["w1"], prepped["b1"]
    w2_p, b2_p = prepped["w2"], prepped["b2"]
    w3_p, b3_p = prepped["w3"], prepped["b3"]
    pad_h = w1_p.shape[1]
    pad_o = w3_p.shape[1]

    batch = x.shape[0]
    batch_al = _round_up(batch, SUBLANE)
    tb = min(_round_up(tile_b, SUBLANE), batch_al)   # sublane-aligned batch tile
    grid_n = pl.cdiv(batch_al, tb)
    batch_p = grid_n * tb

    x_p = x.astype(jnp.float32)
    if batch_p != batch:
        # Only the ragged tail of the last tile is padded (sliced off below).
        x_p = jnp.pad(x_p, ((0, batch_p - batch), (0, 0)))

    flops = 2 * batch * (in_f * hidden + hidden * hidden + hidden * out_f)
    bytes_accessed = (
        x_p.size * 4
        + batch_p * out_f * 4
        + sum(int(a.size) * 4 for a in (w1_p, b1_p, w2_p, b2_p, w3_p, b3_p))
    )

    def resident(shape):
        # Same block every grid step -> stays VMEM-resident (no re-DMA).
        return pl.BlockSpec(shape, lambda i: (0, 0))

    out = pl.pallas_call(
        blob_mlp_kernel,
        out_shape=jax.ShapeDtypeStruct((batch_p, out_f), jnp.float32),
        grid=(grid_n,),
        in_specs=[
            pl.BlockSpec((tb, in_f), lambda i: (i, 0)),   # x: tiled over batch
            resident((in_f, pad_h)),
            resident((1, pad_h)),
            resident((pad_h, pad_h)),
            resident((1, pad_h)),
            resident((pad_h, pad_o)),
            resident((1, pad_o)),
        ],
        out_specs=pl.BlockSpec((tb, out_f), lambda i: (i, 0)),  # slim, un-padded output
        compiler_params=pltpu.CompilerParams(
            dimension_semantics=("parallel",),     # v7x: both TCs take batch tiles
            vmem_limit_bytes=32 * 1024 * 1024,
        ),
        cost_estimate=pl.CostEstimate(
            flops=int(flops), transcendentals=0, bytes_accessed=int(bytes_accessed)
        ),
    )(x_p, w1_p, b1_p, w2_p, b2_p, w3_p, b3_p)

    return out[:batch] if batch_p != batch else out


def init_params(key, input_features, output_features, hidden_units=8):
    """Deterministic init mimicking nn.Linear's uniform(-1/sqrt(fan_in), 1/sqrt(fan_in))."""
    def linear_init(k, fan_in, fan_out):
        kw, kb = jax.random.split(k)
        bound = 1.0 / jnp.sqrt(fan_in)
        w = jax.random.uniform(kw, (fan_out, fan_in), jnp.float32, -bound, bound)
        b = jax.random.uniform(kb, (fan_out,), jnp.float32, -bound, bound)
        return w, b

    k1, k2, k3 = jax.random.split(key, 3)
    w1, b1 = linear_init(k1, input_features, hidden_units)
    w2, b2 = linear_init(k2, hidden_units, hidden_units)
    w3, b3 = linear_init(k3, hidden_units, output_features)
    return {"w1": w1, "b1": b1, "w2": w2, "b2": b2, "w3": w3, "b3": b3}


def reference_forward(x, params):
    h = jnp.maximum(x @ params["w1"].T + params["b1"], 0.0)
    h = jnp.maximum(h @ params["w2"].T + params["b2"], 0.0)
    return h @ params["w3"].T + params["b3"]


if __name__ == "__main__":
    key = jax.random.PRNGKey(0)
    k_params, k_x, k_x2 = jax.random.split(key, 3)

    input_features = 2    # "blob" dataset: 2-D points
    output_features = 4   # 4 classes
    hidden_units = 8
    batch = 8

    params = init_params(k_params, input_features, output_features, hidden_units)
    prepped = prepare_params(params)          # weight prep hoisted: runs once

    x = jax.random.normal(k_x, (batch, input_features), jnp.float32)
    out = jax.block_until_ready(blob_model_forward(x, prepped))
    ref = reference_forward(x, params)
    assert out.shape == (batch, output_features)
    assert jnp.allclose(out, ref, atol=1e-5, rtol=1e-5)

    # Multi-tile grid (grid=(3,)) with a ragged last tile (batch not a tile multiple).
    x_big = jax.random.normal(k_x2, (520, input_features), jnp.float32)
    out_big = jax.block_until_ready(blob_model_forward(x_big, prepped, tile_b=256))
    ref_big = reference_forward(x_big, params)
    assert out_big.shape == (520, output_features)
    assert jnp.allclose(out_big, ref_big, atol=1e-4, rtol=1e-4)

    print("KERNEL_OK")
</pallas_src>

<mosaic_0001>
module attributes {stable_mosaic.version = 11 : i64} {
  func.func @blob_mlp_kernel(%arg0: i32, %arg1: memref<8x2xf32, #tpu.memory_space<vmem>>, %arg2: memref<2x128xf32, #tpu.memory_space<vmem>>, %arg3: memref<1x128xf32, #tpu.memory_space<vmem>>, %arg4: memref<128x128xf32, #tpu.memory_space<vmem>>, %arg5: memref<1x128xf32, #tpu.memory_space<vmem>>, %arg6: memref<128x128xf32, #tpu.memory_space<vmem>>, %arg7: memref<1x128xf32, #tpu.memory_space<vmem>>, %arg8: memref<8x4xf32, #tpu.memory_space<vmem>>) attributes {dimension_semantics = [#tpu.dimension_semantics<parallel>], iteration_bounds = array<i64: 1>, scalar_prefetch = 0 : i64, scratch_operands = 0 : i64, tpu.core_type = #tpu.core_type<tc>, window_params = [{transform_indices = @transform_0, window_bounds = array<i64: 8, 2>}, {pipeline_mode = #tpu.pipeline_mode<synchronous>, transform_indices = @transform_1, window_bounds = array<i64: 2, 128>}, {pipeline_mode = #tpu.pipeline_mode<synchronous>, transform_indices = @transform_2, window_bounds = array<i64: 1, 128>}, {pipeline_mode = #tpu.pipeline_mode<synchronous>, transform_indices = @transform_3, window_bounds = array<i64: 128, 128>}, {pipeline_mode = #tpu.pipeline_mode<synchronous>, transform_indices = @transform_4, window_bounds = array<i64: 1, 128>}, {pipeline_mode = #tpu.pipeline_mode<synchronous>, transform_indices = @transform_5, window_bounds = array<i64: 128, 128>}, {pipeline_mode = #tpu.pipeline_mode<synchronous>, transform_indices = @transform_6, window_bounds = array<i64: 1, 128>}, {transform_indices = @transform_7, window_bounds = array<i64: 8, 4>}]} {
    %c0 = arith.constant 0 : index
    %c0_0 = arith.constant 0 : index
    %0 = vector.load %arg1[%c0, %c0_0] : memref<8x2xf32, #tpu.memory_space<vmem>>, vector<8x2xf32>
    %c0_1 = arith.constant 0 : index
    %c0_2 = arith.constant 0 : index
    %1 = vector.load %arg2[%c0_1, %c0_2] : memref<2x128xf32, #tpu.memory_space<vmem>>, vector<2x128xf32>
    %c0_3 = arith.constant 0 : index
    %c0_4 = arith.constant 0 : index
    %2 = vector.load %arg3[%c0_3, %c0_4] : memref<1x128xf32, #tpu.memory_space<vmem>>, vector<1x128xf32>
    %3 = vector.shape_cast %2 : vector<1x128xf32> to vector<1x128xf32>
    %4 = vector.broadcast %3 : vector<1x128xf32> to vector<8x128xf32>
    %5 = vector.extract_strided_slice %0 {offsets = [0, 0], sizes = [8, 1], strides = [1, 1]} : vector<8x2xf32> to vector<8x1xf32>
    %6 = vector.extract_strided_slice %1 {offsets = [0, 0], sizes = [1, 128], strides = [1, 1]} : vector<2x128xf32> to vector<1x128xf32>
    %7 = vector.broadcast %5 : vector<8x1xf32> to vector<8x128xf32>
    %8 = vector.broadcast %6 : vector<1x128xf32> to vector<8x128xf32>
    %9 = arith.mulf %7, %8 : vector<8x128xf32>
    %10 = arith.addf %4, %9 : vector<8x128xf32>
    %11 = vector.extract_strided_slice %0 {offsets = [0, 1], sizes = [8, 1], strides = [1, 1]} : vector<8x2xf32> to vector<8x1xf32>
    %12 = vector.extract_strided_slice %1 {offsets = [1, 0], sizes = [1, 128], strides = [1, 1]} : vector<2x128xf32> to vector<1x128xf32>
    %13 = vector.broadcast %11 : vector<8x1xf32> to vector<8x128xf32>
    %14 = vector.broadcast %12 : vector<1x128xf32> to vector<8x128xf32>
    %15 = arith.mulf %13, %14 : vector<8x128xf32>
    %16 = arith.addf %10, %15 : vector<8x128xf32>
    %cst = arith.constant 0.000000e+00 : f32
    %17 = vector.broadcast %cst : f32 to vector<8x128xf32>
    %18 = arith.maximumf %16, %17 : vector<8x128xf32>
    %c0_5 = arith.constant 0 : index
    %c0_6 = arith.constant 0 : index
    %19 = vector.load %arg4[%c0_5, %c0_6] : memref<128x128xf32, #tpu.memory_space<vmem>>, vector<128x128xf32>
    %cst_7 = arith.constant dense<0.000000e+00> : vector<8x128xf32>
    %20 = tpu.matmul %18, %19, %cst_7 {dimension_numbers = #tpu.dot_dimension_numbers<[1], [0], [0], [1], [0, 0, 1, 1], [], []>} : vector<8x128xf32>, vector<128x128xf32>, vector<8x128xf32> -> vector<8x128xf32>
    %c0_8 = arith.constant 0 : index
    %c0_9 = arith.constant 0 : index
    %21 = vector.load %arg5[%c0_8, %c0_9] : memref<1x128xf32, #tpu.memory_space<vmem>>, vector<1x128xf32>
    %22 = vector.broadcast %21 : vector<1x128xf32> to vector<8x128xf32>
    %23 = arith.addf %20, %22 : vector<8x128xf32>
    %cst_10 = arith.constant 0.000000e+00 : f32
    %24 = vector.broadcast %cst_10 : f32 to vector<8x128xf32>
    %25 = arith.maximumf %23, %24 : vector<8x128xf32>
    %c0_11 = arith.constant 0 : index
    %c0_12 = arith.constant 0 : index
    %26 = vector.load %arg6[%c0_11, %c0_12] : memref<128x128xf32, #tpu.memory_space<vmem>>, vector<128x128xf32>
    %cst_13 = arith.constant dense<0.000000e+00> : vector<8x128xf32>
    %27 = tpu.matmul %25, %26, %cst_13 {dimension_numbers = #tpu.dot_dimension_numbers<[1], [0], [0], [1], [0, 0, 1, 1], [], []>} : vector<8x128xf32>, vector<128x128xf32>, vector<8x128xf32> -> vector<8x128xf32>
    %c0_14 = arith.constant 0 : index
    %c0_15 = arith.constant 0 : index
    %28 = vector.load %arg7[%c0_14, %c0_15] : memref<1x128xf32, #tpu.memory_space<vmem>>, vector<1x128xf32>
    %29 = vector.broadcast %28 : vector<1x128xf32> to vector<8x128xf32>
    %30 = arith.addf %27, %29 : vector<8x128xf32>
    %31 = vector.extract_strided_slice %30 {offsets = [0, 0], sizes = [8, 4], strides = [1, 1]} : vector<8x128xf32> to vector<8x4xf32>
    %c0_16 = arith.constant 0 : index
    %c0_17 = arith.constant 0 : index
    %32 = vector.load %arg8[%c0_16, %c0_17] : memref<8x4xf32, #tpu.memory_space<vmem>>, vector<8x4xf32>
    tpu.vector_store %arg8[%c0_16, %c0_17], %31 {strides = array<i32>} : memref<8x4xf32, #tpu.memory_space<vmem>>, vector<8x4xf32>,
    return
  }
  func.func @transform_0(%arg0: i32) -> (i32, i32) {
    %c0_i32 = arith.constant 0 : i32
    %c0_i32_0 = arith.constant 0 : i32
    return %arg0, %c0_i32 : i32, i32
  }
  func.func @transform_1(%arg0: i32) -> (i32, i32) {
    %c0_i32 = arith.constant 0 : i32
    %c0_i32_0 = arith.constant 0 : i32
    %c0_i32_1 = arith.constant 0 : i32
    return %c0_i32, %c0_i32_0 : i32, i32
  }
  func.func @transform_2(%arg0: i32) -> (i32, i32) {
    %c0_i32 = arith.constant 0 : i32
    %c0_i32_0 = arith.constant 0 : i32
    %c0_i32_1 = arith.constant 0 : i32
    return %c0_i32, %c0_i32_0 : i32, i32
  }
  func.func @transform_3(%arg0: i32) -> (i32, i32) {
    %c0_i32 = arith.constant 0 : i32
    %c0_i32_0 = arith.constant 0 : i32
    %c0_i32_1 = arith.constant 0 : i32
    return %c0_i32, %c0_i32_0 : i32, i32
  }
  func.func @transform_4(%arg0: i32) -> (i32, i32) {
    %c0_i32 = arith.constant 0 : i32
    %c0_i32_0 = arith.constant 0 : i32
    %c0_i32_1 = arith.constant 0 : i32
    return %c0_i32, %c0_i32_0 : i32, i32
  }
  func.func @transform_5(%arg0: i32) -> (i32, i32) {
    %c0_i32 = arith.constant 0 : i32
    %c0_i32_0 = arith.constant 0 : i32
    %c0_i32_1 = arith.constant 0 : i32
    return %c0_i32, %c0_i32_0 : i32, i32
  }
  func.func @transform_6(%arg0: i32) -> (i32, i32) {
    %c0_i32 = arith.constant 0 : i32
    %c0_i32_0 = arith.constant 0 : i32
    %c0_i32_1 = arith.constant 0 : i32
    return %c0_i32, %c0_i32_0 : i32, i32
  }
  func.func @transform_7(%arg0: i32) -> (i32, i32) {
    %c0_i32 = arith.constant 0 : i32
    %c0_i32_0 = arith.constant 0 : i32
    return %arg0, %c0_i32 : i32, i32
  }
}

</mosaic_0001>

<llo_original>
// kernel: tpu_custom_call.1
$region0: #{tpu_custom_call.1}
  #allocation0 [shape = 'u32[]', space=smem, size = 0x4, offset = 0x4, fixed_abs, tag = 'smem constant byte address 0x4 - core index']
  #allocation1 [shape = 'u32[144,128]{1,0:T(1,128)}', space=vmem, size = 0x12000, scoped, tag = 'internal scratch']
  %s0 = inlined_call_operand.vmem [shape: f32[8,2], index: 0, kind: input, shape index: {}]
  %s1 = inlined_call_operand.vmem [shape: f32[2,128], index: 1, kind: input, shape index: {}]
  %s2 = inlined_call_operand.vmem [shape: f32[1,128], index: 2, kind: input, shape index: {}]
  %s3 = inlined_call_operand.hbm [shape: f32[128,128], index: 3, kind: input, shape index: {}]
  %s4 = inlined_call_operand.vmem [shape: f32[1,128], index: 4, kind: input, shape index: {}]
  %s5 = inlined_call_operand.hbm [shape: f32[128,128], index: 5, kind: input, shape index: {}]
  %s6 = inlined_call_operand.vmem [shape: f32[1,128], index: 6, kind: input, shape index: {}]
  %s7 = inlined_call_operand.vmem [shape: f32[8,4], index: 7, kind: output, shape index: {}]
  %s8 = sld [smem:[#allocation0]]
  $region46: #{tpu_custom_call.1} parent=0
    _
  %s10 = ssub.s32 1, %s8
  %s11 = scalar_select 0, %s10, %s8
  $region1: #{tpu_custom_call.1} parent=0
    #allocation2 [shape = 'u8[65536]{0}', space=vmem, size = 0x10000, scoped, tag = 'input window, operand 3, single buffered']
    #allocation3 [shape = 's32[1]{0}', space=sflag, size = 0x4, scoped, tag = 'scoped memory for tpu_custom_call.1']
    #allocation4 [shape = 'u8[65536]{0}', space=vmem, size = 0x10000, scoped, tag = 'input window, operand 5, single buffered']
    #allocation5 [shape = 's32[1]{0}', space=sflag, size = 0x4, scoped, tag = 'scoped memory for tpu_custom_call.1']
    %12 = vsyncpa [#allocation3], 0
    %13 = vsyncpa [#allocation5], 0
    // Predicated region
    $region2: #{tpu_custom_call.1} parent=1 // pred_check
      _
    $region3: #{tpu_custom_call.1} parent=1 // pred_check_branch
      %15 = sbr.rel (0) target = $region5
    $region4: #{tpu_custom_call.1} parent=1 // pred_region
      _
    $region5: #{tpu_custom_call.1} parent=1 // pred_fallthru
      _
    // Predicated region
    $region6: #{tpu_custom_call.1} parent=1 // pred_check
      _
    $region7: #{tpu_custom_call.1} parent=1 // pred_check_branch
      %17 = sbr.rel (0) target = $region9
    $region8: #{tpu_custom_call.1} parent=1 // pred_region
      _
    $region9: #{tpu_custom_call.1} parent=1 // pred_fallthru
      _
    // Predicated region
    $region10: #{tpu_custom_call.1} parent=1 // pred_check
      _
    $region11: #{tpu_custom_call.1} parent=1 // pred_check_branch
      %19 = sbr.rel (0) target = $region13
    $region12: #{tpu_custom_call.1} parent=1 // pred_region
      _
    $region13: #{tpu_custom_call.1} parent=1 // pred_fallthru
      _
    // Predicated region
    $region14: #{tpu_custom_call.1} parent=1 // pred_check
      _
    $region15: #{tpu_custom_call.1} parent=1 // pred_check_branch
      %21 = sbr.rel (0) target = $region17
    $region16: #{tpu_custom_call.1} parent=1 // pred_region
      %s23 = ssub.s32 2048, 2048
      %24 = vsyncadd [#allocation3], %s23
      %s25 = sshll.u32 [#allocation2], 4
      %s26 = int_to_ptr.vmem [resolvable:$true] %s25
      %31 = dma.hbm_to_vmem [thread:$0]  %s3, 2048, %s26, [#allocation3], 128, 128, 8
    $region17: #{tpu_custom_call.1} parent=1 // pred_fallthru
      _
    // Predicated region
    $region18: #{tpu_custom_call.1} parent=1 // pred_check
      _
    $region19: #{tpu_custom_call.1} parent=1 // pred_check_branch
      %33 = sbr.rel (0) target = $region21
    $region20: #{tpu_custom_call.1} parent=1 // pred_region
      _
    $region21: #{tpu_custom_call.1} parent=1 // pred_fallthru
      _
    // Predicated region
    $region22: #{tpu_custom_call.1} parent=1 // pred_check
      _
    $region23: #{tpu_custom_call.1} parent=1 // pred_check_branch
      %35 = sbr.rel (0) target = $region25
    $region24: #{tpu_custom_call.1} parent=1 // pred_region
      %s37 = ssub.s32 2048, 2048
      %38 = vsyncadd [#allocation5], %s37
      %s39 = sshll.u32 [#allocation4], 4
      %s40 = int_to_ptr.vmem [resolvable:$true] %s39
      %45 = dma.hbm_to_vmem [thread:$0]  %s5, 2048, %s40, [#allocation5], 128, 128, 8
    $region25: #{tpu_custom_call.1} parent=1 // pred_fallthru
      _
    // Predicated region
    $region26: #{tpu_custom_call.1} parent=1 // pred_check
      _
    $region27: #{tpu_custom_call.1} parent=1 // pred_check_branch
      %47 = sbr.rel (0) target = $region29
    $region28: #{tpu_custom_call.1} parent=1 // pred_region
      _
    $region29: #{tpu_custom_call.1} parent=1 // pred_fallthru
      _
    // Predicated region
    $region30: #{tpu_custom_call.1} parent=1 // pred_check
      _
    $region31: #{tpu_custom_call.1} parent=1 // pred_check_branch
      %49 = sbr.rel (0) target = $region33
    $region32: #{tpu_custom_call.1} parent=1 // pred_region
      %50 = dma.done [#allocation3], 2048
    $region33: #{tpu_custom_call.1} parent=1 // pred_fallthru
      _
    // Predicated region
    $region34: #{tpu_custom_call.1} parent=1 // pred_check
      _
    $region35: #{tpu_custom_call.1} parent=1 // pred_check_branch
      %52 = sbr.rel (0) target = $region37
    $region36: #{tpu_custom_call.1} parent=1 // pred_region
      %53 = dma.done [#allocation5], 2048
    $region37: #{tpu_custom_call.1} parent=1 // pred_fallthru
      _
    %v54 = vld [vmem:[%s0] sm:$0xff]
    %v55 = vld [vmem:[%s1] sm:$0x3]
    %v56 = vld [vmem:[%s2] sm:$0x1]
    %v58 = vlaneseq
    %v59 = vshrl.u32 %v58, 7
    %v60 = vsub.s32 0, %v59
    %v61 = vrot.slane %v56, %v60
    %64 = vset.pattern.permute.xlu0 0
    %65 = vperm.xlu0 %64, %v54
    %v66 = vpop.permute.xlu0 %65
    %v68 = vlaneseq
    %v69 = vshrl.u32 %v68, 7
    %v70 = vsub.s32 0, %v69
    %v71 = vrot.slane %v55, %v70
    %v72 = vmul.f32 %v66, %v71
    %v73 = vadd.f32 %v61, %v72
    %74 = vset.pattern.permute.xlu0 1
    %75 = vperm.xlu0 %74, %v54
    %v76 = vpop.permute.xlu0 %75
    %v78 = vlaneseq
    %v79 = vshrl.u32 %v78, 7
    %v80 = vsub.s32 1, %v79
    %v81 = vrot.slane %v55, %v80
    %v82 = vmul.f32 %v76, %v81
    %v83 = vadd.f32 %v73, %v82
    %v84 = vmax.f32 %v83, 0.0
    %v85 = vld [vmem:[#allocation2] sm:$0xff]
    %v86 = vld [vmem:[#allocation2 + $0x8] sm:$0xff]
    %v87 = vld [vmem:[#allocation2 + $0x10] sm:$0xff]
    %v88 = vld [vmem:[#allocation2 + $0x18] sm:$0xff]
    %v89 = vld [vmem:[#allocation2 + $0x20] sm:$0xff]
    %v90 = vld [vmem:[#allocation2 + $0x28] sm:$0xff]
    %v91 = vld [vmem:[#allocation2 + $0x30] sm:$0xff]
    %v92 = vld [vmem:[#allocation2 + $0x38] sm:$0xff]
    %v93 = vld [vmem:[#allocation2 + $0x40] sm:$0xff]
    %v94 = vld [vmem:[#allocation2 + $0x48] sm:$0xff]
    %v95 = vld [vmem:[#allocation2 + $0x50] sm:$0xff]
    %v96 = vld [vmem:[#allocation2 + $0x58] sm:$0xff]
    %v97 = vld [vmem:[#allocation2 + $0x60] sm:$0xff]
    %v98 = vld [vmem:[#allocation2 + $0x68] sm:$0xff]
    %v99 = vld [vmem:[#allocation2 + $0x70] sm:$0xff]
    %v100 = vld [vmem:[#allocation2 + $0x78] sm:$0xff]
    %v101 = vld [vmem:[%s4] sm:$0x1]
    %v103 = vlaneseq
    %v104 = vshrl.u32 %v103, 7
    %v105 = vsub.s32 0, %v104
    %v106 = vrot.slane %v101, %v105
    %108 = vmatprep.subr.mxu0 0.0
    %109 = vmatpush1.msra.mxu0 %v100
    %110 = vmatprep.subr.mxu0 0.0
    %111 = vmatpush1.msra.mxu0 %v99
    %112 = vmatprep.subr.mxu0 0.0
    %113 = vmatpush1.msra.mxu0 %v98
    %114 = vmatprep.subr.mxu0 0.0
    %115 = vmatpush1.msra.mxu0 %v97
    %116 = vmatprep.subr.mxu0 0.0
    %117 = vmatpush1.msra.mxu0 %v96
    %118 = vmatprep.subr.mxu0 0.0
    %119 = vmatpush1.msra.mxu0 %v95
    %120 = vmatprep.subr.mxu0 0.0
    %121 = vmatpush1.msra.mxu0 %v94
    %122 = vmatprep.subr.mxu0 0.0
    %123 = vmatpush1.msra.mxu0 %v93
    %124 = vmatprep.subr.mxu0 0.0
    %125 = vmatpush1.msra.mxu0 %v92
    %126 = vmatprep.subr.mxu0 0.0
    %127 = vmatpush1.msra.mxu0 %v91
    %128 = vmatprep.subr.mxu0 0.0
    %129 = vmatpush1.msra.mxu0 %v90
    %130 = vmatprep.subr.mxu0 0.0
    %131 = vmatpush1.msra.mxu0 %v89
    %132 = vmatprep.subr.mxu0 0.0
    %133 = vmatpush1.msra.mxu0 %v88
    %134 = vmatprep.subr.mxu0 0.0
    %135 = vmatpush1.msra.mxu0 %v87
    %136 = vmatprep.subr.mxu0 0.0
    %137 = vmatpush1.msra.mxu0 %v86
    %138 = vmatprep.subr.mxu0 0.0
    %139 = vmatpush1.msra.mxu0 %v85
    %140 = vmatprep.subr.mxu0 0.0
    %141 = vmatpush2.msra.mxu0 0.0
    %142 = vmatprep.subr.mxu0 0.0
    %143 = vmatpush2.msra.mxu0 0.0
    %144 = vmatprep.subr.mxu0 0.0
    %145 = vmatpush2.msra.mxu0 0.0
    %146 = vmatprep.subr.mxu0 0.0
    %147 = vmatpush2.msra.mxu0 0.0
    %148 = vmatprep.subr.mxu0 0.0
    %149 = vmatpush2.msra.mxu0 0.0
    %150 = vmatprep.subr.mxu0 0.0
    %151 = vmatpush2.msra.mxu0 0.0
    %152 = vmatprep.subr.mxu0 0.0
    %153 = vmatpush2.msra.mxu0 0.0
    %154 = vmatprep.subr.mxu0 0.0
    %155 = vmatpush2.msra.mxu0 0.0
    %156 = vmatprep.subr.mxu0 0.0
    %157 = vmatpush2.msra.mxu0 0.0
    %158 = vmatprep.subr.mxu0 0.0
    %159 = vmatpush2.msra.mxu0 0.0
    %160 = vmatprep.subr.mxu0 0.0
    %161 = vmatpush2.msra.mxu0 0.0
    %162 = vmatprep.subr.mxu0 0.0
    %163 = vmatpush2.msra.mxu0 0.0
    %164 = vmatprep.subr.mxu0 0.0
    %165 = vmatpush2.msra.mxu0 0.0
    %166 = vmatprep.subr.mxu0 0.0
    %167 = vmatpush2.msra.mxu0 0.0
    %168 = vmatprep.subr.mxu0 0.0
    %169 = vmatpush2.msra.mxu0 0.0
    %170 = vmatprep.subr.mxu0 0.0
    %171 = vmatpush2.msra.mxu0 0.0
    %172 = vmatprep.mubr.f32.mxu0 0.0
    %173 = vmatmul.mubr.f32.gmra.mxu0 %v84
    %v174 = vpop.f32.mrf.mxu0
    %v175 = vadd.f32 %v106, %v174
    %v176 = vpop.f32.mrf.mxu0
    %177 = vdwg.mxu0
    %v178 = vmax.f32 %v175, 0.0
    %v179 = vld [vmem:[#allocation4] sm:$0xff]
    %v180 = vld [vmem:[#allocation4 + $0x8] sm:$0xff]
    %v181 = vld [vmem:[#allocation4 + $0x10] sm:$0xff]
    %v182 = vld [vmem:[#allocation4 + $0x18] sm:$0xff]
    %v183 = vld [vmem:[#allocation4 + $0x20] sm:$0xff]
    %v184 = vld [vmem:[#allocation4 + $0x28] sm:$0xff]
    %v185 = vld [vmem:[#allocation4 + $0x30] sm:$0xff]
    %v186 = vld [vmem:[#allocation4 + $0x38] sm:$0xff]
    %v187 = vld [vmem:[#allocation4 + $0x40] sm:$0xff]
    %v188 = vld [vmem:[#allocation4 + $0x48] sm:$0xff]
    %v189 = vld [vmem:[#allocation4 + $0x50] sm:$0xff]
    %v190 = vld [vmem:[#allocation4 + $0x58] sm:$0xff]
    %v191 = vld [vmem:[#allocation4 + $0x60] sm:$0xff]
    %v192 = vld [vmem:[#allocation4 + $0x68] sm:$0xff]
    %v193 = vld [vmem:[#allocation4 + $0x70] sm:$0xff]
    %v194 = vld [vmem:[#allocation4 + $0x78] sm:$0xff]
    %v195 = vld [vmem:[%s6] sm:$0x1]
    %v197 = vlaneseq
    %v198 = vshrl.u32 %v197, 7
    %v199 = vsub.s32 0, %v198
    %v200 = vrot.slane %v195, %v199
    %202 = vmatprep.subr.mxu0 0.0
    %203 = vmatpush1.msra.mxu0 %v194
    %204 = vmatprep.subr.mxu0 0.0
    %205 = vmatpush1.msra.mxu0 %v193
    %206 = vmatprep.subr.mxu0 0.0
    %207 = vmatpush1.msra.mxu0 %v192
    %208 = vmatprep.subr.mxu0 0.0
    %209 = vmatpush1.msra.mxu0 %v191
    %210 = vmatprep.subr.mxu0 0.0
    %211 = vmatpush1.msra.mxu0 %v190
    %212 = vmatprep.subr.mxu0 0.0
    %213 = vmatpush1.msra.mxu0 %v189
    %214 = vmatprep.subr.mxu0 0.0
    %215 = vmatpush1.msra.mxu0 %v188
    %216 = vmatprep.subr.mxu0 0.0
    %217 = vmatpush1.msra.mxu0 %v187
    %218 = vmatprep.subr.mxu0 0.0
    %219 = vmatpush1.msra.mxu0 %v186
    %220 = vmatprep.subr.mxu0 0.0
    %221 = vmatpush1.msra.mxu0 %v185
    %222 = vmatprep.subr.mxu0 0.0
    %223 = vmatpush1.msra.mxu0 %v184
    %224 = vmatprep.subr.mxu0 0.0
    %225 = vmatpush1.msra.mxu0 %v183
    %226 = vmatprep.subr.mxu0 0.0
    %227 = vmatpush1.msra.mxu0 %v182
    %228 = vmatprep.subr.mxu0 0.0
    %229 = vmatpush1.msra.mxu0 %v181
    %230 = vmatprep.subr.mxu0 0.0
    %231 = vmatpush1.msra.mxu0 %v180
    %232 = vmatprep.subr.mxu0 0.0
    %233 = vmatpush1.msra.mxu0 %v179
    %234 = vmatprep.subr.mxu0 0.0
    %235 = vmatpush2.msra.mxu0 0.0
    %236 = vmatprep.subr.mxu0 0.0
    %237 = vmatpush2.msra.mxu0 0.0
    %238 = vmatprep.subr.mxu0 0.0
    %239 = vmatpush2.msra.mxu0 0.0
    %240 = vmatprep.subr.mxu0 0.0
    %241 = vmatpush2.msra.mxu0 0.0
    %242 = vmatprep.subr.mxu0 0.0
    %243 = vmatpush2.msra.mxu0 0.0
    %244 = vmatprep.subr.mxu0 0.0
    %245 = vmatpush2.msra.mxu0 0.0
    %246 = vmatprep.subr.mxu0 0.0
    %247 = vmatpush2.msra.mxu0 0.0
    %248 = vmatprep.subr.mxu0 0.0
    %249 = vmatpush2.msra.mxu0 0.0
    %250 = vmatprep.subr.mxu0 0.0
    %251 = vmatpush2.msra.mxu0 0.0
    %252 = vmatprep.subr.mxu0 0.0
    %253 = vmatpush2.msra.mxu0 0.0
    %254 = vmatprep.subr.mxu0 0.0
    %255 = vmatpush2.msra.mxu0 0.0
    %256 = vmatprep.subr.mxu0 0.0
    %257 = vmatpush2.msra.mxu0 0.0
    %258 = vmatprep.subr.mxu0 0.0
    %259 = vmatpush2.msra.mxu0 0.0
    %260 = vmatprep.subr.mxu0 0.0
    %261 = vmatpush2.msra.mxu0 0.0
    %262 = vmatprep.subr.mxu0 0.0
    %263 = vmatpush2.msra.mxu0 0.0
    %264 = vmatprep.subr.mxu0 0.0
    %265 = vmatpush2.msra.mxu0 0.0
    %266 = vmatprep.mubr.f32.mxu0 0.0
    %267 = vmatmul.mubr.f32.gmra.mxu0 %v178
    %v268 = vpop.f32.mrf.mxu0
    %v269 = vadd.f32 %v200, %v268
    %v270 = vpop.f32.mrf.mxu0
    %271 = vdwg.mxu0
    %vm272 = vcmask 31744
    %273 = vst.msk [vmem:[%s7] sm:$0xff] %vm272, %v269
    // Predicated region
    $region38: #{tpu_custom_call.1} parent=1 // pred_check
      _
    $region39: #{tpu_custom_call.1} parent=1 // pred_check_branch
      %275 = sbr.rel (0) target = $region41
    $region40: #{tpu_custom_call.1} parent=1 // pred_region
      _
    $region41: #{tpu_custom_call.1} parent=1 // pred_fallthru
      _
    // Predicated region
    $region42: #{tpu_custom_call.1} parent=1 // pred_check
      _
    $region43: #{tpu_custom_call.1} parent=1 // pred_check_branch
      %277 = sbr.rel (0) target = $region45
    $region44: #{tpu_custom_call.1} parent=1 // pred_region
      _
    $region45: #{tpu_custom_call.1} parent=1 // pred_fallthru
      _
    %278 = vsyncpa [#allocation3], 1
    %279 = vsyncpa [#allocation5], 1

</llo_original>
